<compile_context>
chip_gen: v7x
topology: tpu7x:2x2x1
jax: 0.10.0
libtpu: 0.0.40
codegen_flags: <defaults>
</compile_context>

<pallas_src>
import functools

import jax
import jax.numpy as jnp
from jax.experimental import pallas as pl
from jax.experimental.pallas import tpu as pltpu

LANE = 128                              # pad every feature dim to a multiple of this
SUBLANE = 8                             # batch tiles must be a multiple of this
VMEM_BUDGET_BYTES = 24 * 1024 * 1024    # headroom under the 32 MiB scoped limit we request


def _round_up(x, m):
    return ((x + m - 1) // m) * m


# ----------------------------------------------------------------------------- kernel
def autoencoder_kernel(n_layers, tanh_layer_idx, *refs):
    """Fused MLP autoencoder forward on one batch tile.

    refs = (x_ref, w0, b0, w1, b1, ..., out_ref)
      x_ref : [TB, D0p]      bf16 (zero-padded features)
      wi    : [din_p, dout_p] bf16 (zero-padded)
      bi    : [1, dout_p]     f32  (zero-padded)
      out   : [TB, Dlast_p]   f32  (lane-dense)
    """
    x_ref = refs[0]
    out_ref = refs[-1]
    param_refs = refs[1:-1]

    h = x_ref[...]                                              # bf16
    for i in range(n_layers):                                   # unrolled at trace time
        w = param_refs[2 * i][...]                              # [din_p, dout_p] bf16
        b = param_refs[2 * i + 1][...]                          # [1, dout_p]     f32
        z = jnp.dot(h, w, preferred_element_type=jnp.float32) + b
        a = jnp.tanh(z) if i == tanh_layer_idx else jnp.maximum(z, 0.0)
        if i + 1 < n_layers:
            h = a.astype(jnp.bfloat16)                          # bf16 inputs for next MXU pass
        else:
            out_ref[...] = a.astype(out_ref.dtype)              # unmasked lane-dense store


# ------------------------------------------------------------------------- parameters
def make_params(key, input_dim, hidden, latent_dim):
    """f32 params mirroring the PyTorch module; W stored as [in, out], b as [1, out]."""
    enc_dims = [(input_dim, hidden[0])]
    for i in range(1, len(hidden)):
        enc_dims.append((hidden[i - 1], hidden[i]))
    enc_dims.append((hidden[-1], latent_dim))

    dec_dims = [(latent_dim, hidden[-1])]
    for i in range(len(hidden) - 1, 0, -1):
        dec_dims.append((hidden[i], hidden[i - 1]))
    dec_dims.append((hidden[0], input_dim))

    params = []
    for (din, dout) in enc_dims + dec_dims:
        key, kw, kb = jax.random.split(key, 3)
        bound = 1.0 / (din ** 0.5)                  # PyTorch nn.Linear default init range
        w = jax.random.uniform(kw, (din, dout), jnp.float32, -bound, bound)
        b = jax.random.uniform(kb, (1, dout), jnp.float32, -bound, bound)
        params.append((w, b))
    tanh_layer_idx = len(enc_dims) - 1              # encoder output layer uses tanh
    return params, tanh_layer_idx


def prepare_padded_params(params):
    """Zero-pad every layer to lane-aligned [din_p, dout_p]; cast W to bf16 (do once)."""
    padded = []
    for w, b in params:
        din, dout = w.shape
        din_p, dout_p = _round_up(din, LANE), _round_up(dout, LANE)
        wp = jnp.zeros((din_p, dout_p), jnp.bfloat16).at[:din, :dout].set(
            w.astype(jnp.bfloat16))
        bp = jnp.zeros((1, dout_p), jnp.float32).at[:, :dout].set(b)
        padded.append((wp, bp))
    return padded


def _pick_batch_tile(batch, in_dim_p, out_dim_p, max_dim_p, param_bytes):
    """Largest batch tile (<=512 rows) whose VMEM estimate fits the budget."""
    tb = _round_up(min(batch, 512), SUBLANE)
    while tb > SUBLANE:
        io_bytes = 2 * tb * (in_dim_p * 2 + out_dim_p * 4)   # double-buffered x(bf16)/out(f32)
        act_bytes = 3 * tb * max_dim_p * 4                   # live activation headroom
        if param_bytes + io_bytes + act_bytes <= VMEM_BUDGET_BYTES:
            break
        tb = max(SUBLANE, _round_up(tb // 2, SUBLANE))
    return tb


# ---------------------------------------------------------------------------- forward
def autoencoder_forward(x, padded_params, tanh_layer_idx, out_dim):
    batch, in_dim = x.shape
    n_layers = len(padded_params)
    in_dim_p = padded_params[0][0].shape[0]
    out_dim_p = padded_params[-1][0].shape[1]
    max_dim_p = max(max(w.shape) for w, _ in padded_params)

    flat_params, param_bytes = [], 0
    for w, b in padded_params:
        flat_params.extend([w, b])
        param_bytes += w.size * w.dtype.itemsize + b.size * b.dtype.itemsize

    tb = _pick_batch_tile(batch, in_dim_p, out_dim_p, max_dim_p, param_bytes)
    batch_p = _round_up(batch, tb)

    # Zero-pad x on both axes; cast to bf16 (halves input DMA, feeds bf16 MXU).
    xp = jnp.zeros((batch_p, in_dim_p), jnp.bfloat16)
    xp = xp.at[:batch, :in_dim].set(x.astype(jnp.bfloat16))

    grid = (batch_p // tb,)
    kernel = functools.partial(autoencoder_kernel, n_layers, tanh_layer_idx)

    in_specs = [pl.BlockSpec((tb, in_dim_p), lambda i: (i, 0))]
    for p in flat_params:
        # Constant index map -> params stay VMEM-resident across grid steps.
        in_specs.append(pl.BlockSpec(p.shape, lambda i: (0, 0)))
    out_specs = pl.BlockSpec((tb, out_dim_p), lambda i: (i, 0))

    flops = 2 * batch_p * sum(w.shape[0] * w.shape[1] for w, _ in padded_params)
    transcendentals = batch_p * padded_params[tanh_layer_idx][0].shape[1]
    bytes_accessed = param_bytes + xp.size * 2 + batch_p * out_dim_p * 4

    out = pl.pallas_call(
        kernel,
        grid=grid,
        out_shape=jax.ShapeDtypeStruct((batch_p, out_dim_p), jnp.float32),
        in_specs=in_specs,
        out_specs=out_specs,
        compiler_params=pltpu.CompilerParams(
            dimension_semantics=("parallel",),       # shard batch steps across TCs (v7x)
            vmem_limit_bytes=32 * 1024 * 1024,       # explicit limit; TB sized with headroom
        ),
        cost_estimate=pl.CostEstimate(
            flops=flops, transcendentals=transcendentals, bytes_accessed=bytes_accessed
        ),
    )(xp, *flat_params)

    return out[:batch, :out_dim]


# -------------------------------------------------------------------------- references
def reference_forward(x, params, tanh_layer_idx, bf16_matmul):
    h = x
    for i, (w, b) in enumerate(params):
        if bf16_matmul:
            z = jnp.dot(h.astype(jnp.bfloat16), w.astype(jnp.bfloat16),
                        preferred_element_type=jnp.float32) + b
        else:
            z = jnp.dot(h, w) + b
        h = jnp.tanh(z) if i == tanh_layer_idx else jnp.maximum(z, 0.0)
    return h


if __name__ == "__main__":
    # Small shapes consistent with the module (args.input_dim, args.hidden, args.latent_dim).
    batch = 32
    input_dim = 32
    hidden = [64, 32]
    latent_dim = 16

    key = jax.random.PRNGKey(0)
    kx, kp = jax.random.split(key)
    x = jax.random.normal(kx, (batch, input_dim), jnp.float32)

    params, tanh_layer_idx = make_params(kp, input_dim, hidden, latent_dim)
    padded_params = prepare_padded_params(params)

    out = autoencoder_forward(x, padded_params, tanh_layer_idx, input_dim)
    out = jax.block_until_ready(out)
    assert out.shape == (batch, input_dim)

    # Tight check vs a reference with identical bf16-input / f32-accum matmul semantics.
    ref_bf16 = reference_forward(x, params, tanh_layer_idx, bf16_matmul=True)
    assert jnp.allclose(out, ref_bf16, atol=1e-3, rtol=1e-3), "mismatch vs bf16 reference"

    # Loose sanity check vs the pure-f32 PyTorch-equivalent forward.
    ref_f32 = reference_forward(x, params, tanh_layer_idx, bf16_matmul=False)
    assert jnp.allclose(out, ref_f32, atol=5e-2, rtol=5e-2), "mismatch vs f32 reference"

    # Also exercise the batch-padding path (batch not a multiple of the sublane width).
    x_odd = jax.random.normal(kx, (13, input_dim), jnp.float32)
    out_odd = jax.block_until_ready(
        autoencoder_forward(x_odd, padded_params, tanh_layer_idx, input_dim))
    ref_odd = reference_forward(x_odd, params, tanh_layer_idx, bf16_matmul=True)
    assert out_odd.shape == (13, input_dim)
    assert jnp.allclose(out_odd, ref_odd, atol=1e-3, rtol=1e-3), "mismatch (odd batch)"

    print("KERNEL_OK")
</pallas_src>

<mosaic_0001>
module attributes {stable_mosaic.version = 11 : i64} {
  func.func @autoencoder_kernel(%arg0: i32, %arg1: memref<32x128xbf16, #tpu.memory_space<vmem>>, %arg2: memref<128x128xbf16, #tpu.memory_space<vmem>>, %arg3: memref<1x128xf32, #tpu.memory_space<vmem>>, %arg4: memref<128x128xbf16, #tpu.memory_space<vmem>>, %arg5: memref<1x128xf32, #tpu.memory_space<vmem>>, %arg6: memref<128x128xbf16, #tpu.memory_space<vmem>>, %arg7: memref<1x128xf32, #tpu.memory_space<vmem>>, %arg8: memref<128x128xbf16, #tpu.memory_space<vmem>>, %arg9: memref<1x128xf32, #tpu.memory_space<vmem>>, %arg10: memref<128x128xbf16, #tpu.memory_space<vmem>>, %arg11: memref<1x128xf32, #tpu.memory_space<vmem>>, %arg12: memref<128x128xbf16, #tpu.memory_space<vmem>>, %arg13: memref<1x128xf32, #tpu.memory_space<vmem>>, %arg14: memref<32x128xf32, #tpu.memory_space<vmem>>) attributes {dimension_semantics = [#tpu.dimension_semantics<parallel>], iteration_bounds = array<i64: 1>, scalar_prefetch = 0 : i64, scratch_operands = 0 : i64, tpu.core_type = #tpu.core_type<tc>, window_params = [{transform_indices = @transform_0, window_bounds = array<i64: 32, 128>}, {pipeline_mode = #tpu.pipeline_mode<synchronous>, transform_indices = @transform_1, window_bounds = array<i64: 128, 128>}, {pipeline_mode = #tpu.pipeline_mode<synchronous>, transform_indices = @transform_2, window_bounds = array<i64: 1, 128>}, {pipeline_mode = #tpu.pipeline_mode<synchronous>, transform_indices = @transform_3, window_bounds = array<i64: 128, 128>}, {pipeline_mode = #tpu.pipeline_mode<synchronous>, transform_indices = @transform_4, window_bounds = array<i64: 1, 128>}, {pipeline_mode = #tpu.pipeline_mode<synchronous>, transform_indices = @transform_5, window_bounds = array<i64: 128, 128>}, {pipeline_mode = #tpu.pipeline_mode<synchronous>, transform_indices = @transform_6, window_bounds = array<i64: 1, 128>}, {pipeline_mode = #tpu.pipeline_mode<synchronous>, transform_indices = @transform_7, window_bounds = array<i64: 128, 128>}, {pipeline_mode = #tpu.pipeline_mode<synchronous>, transform_indices = @transform_8, window_bounds = array<i64: 1, 128>}, {pipeline_mode = #tpu.pipeline_mode<synchronous>, transform_indices = @transform_9, window_bounds = array<i64: 128, 128>}, {pipeline_mode = #tpu.pipeline_mode<synchronous>, transform_indices = @transform_10, window_bounds = array<i64: 1, 128>}, {pipeline_mode = #tpu.pipeline_mode<synchronous>, transform_indices = @transform_11, window_bounds = array<i64: 128, 128>}, {pipeline_mode = #tpu.pipeline_mode<synchronous>, transform_indices = @transform_12, window_bounds = array<i64: 1, 128>}, {transform_indices = @transform_13, window_bounds = array<i64: 32, 128>}]} {
    %c0 = arith.constant 0 : index
    %c0_0 = arith.constant 0 : index
    %0 = vector.load %arg1[%c0, %c0_0] : memref<32x128xbf16, #tpu.memory_space<vmem>>, vector<32x128xbf16>
    %c0_1 = arith.constant 0 : index
    %c0_2 = arith.constant 0 : index
    %1 = vector.load %arg2[%c0_1, %c0_2] : memref<128x128xbf16, #tpu.memory_space<vmem>>, vector<128x128xbf16>
    %c0_3 = arith.constant 0 : index
    %c0_4 = arith.constant 0 : index
    %2 = vector.load %arg3[%c0_3, %c0_4] : memref<1x128xf32, #tpu.memory_space<vmem>>, vector<1x128xf32>
    %cst = arith.constant dense<0.000000e+00> : vector<32x128xf32>
    %3 = tpu.matmul %0, %1, %cst {dimension_numbers = #tpu.dot_dimension_numbers<[1], [0], [0], [1], [0, 0, 1, 1], [], []>} : vector<32x128xbf16>, vector<128x128xbf16>, vector<32x128xf32> -> vector<32x128xf32>
    %4 = vector.broadcast %2 : vector<1x128xf32> to vector<32x128xf32>
    %5 = arith.addf %3, %4 : vector<32x128xf32>
    %cst_5 = arith.constant 0.000000e+00 : f32
    %6 = vector.broadcast %cst_5 : f32 to vector<32x128xf32>
    %7 = arith.maximumf %5, %6 : vector<32x128xf32>
    %8 = arith.truncf %7 : vector<32x128xf32> to vector<32x128xbf16>
    %c0_6 = arith.constant 0 : index
    %c0_7 = arith.constant 0 : index
    %9 = vector.load %arg4[%c0_6, %c0_7] : memref<128x128xbf16, #tpu.memory_space<vmem>>, vector<128x128xbf16>
    %c0_8 = arith.constant 0 : index
    %c0_9 = arith.constant 0 : index
    %10 = vector.load %arg5[%c0_8, %c0_9] : memref<1x128xf32, #tpu.memory_space<vmem>>, vector<1x128xf32>
    %cst_10 = arith.constant dense<0.000000e+00> : vector<32x128xf32>
    %11 = tpu.matmul %8, %9, %cst_10 {dimension_numbers = #tpu.dot_dimension_numbers<[1], [0], [0], [1], [0, 0, 1, 1], [], []>} : vector<32x128xbf16>, vector<128x128xbf16>, vector<32x128xf32> -> vector<32x128xf32>
    %12 = vector.broadcast %10 : vector<1x128xf32> to vector<32x128xf32>
    %13 = arith.addf %11, %12 : vector<32x128xf32>
    %cst_11 = arith.constant 0.000000e+00 : f32
    %14 = vector.broadcast %cst_11 : f32 to vector<32x128xf32>
    %15 = arith.maximumf %13, %14 : vector<32x128xf32>
    %16 = arith.truncf %15 : vector<32x128xf32> to vector<32x128xbf16>
    %c0_12 = arith.constant 0 : index
    %c0_13 = arith.constant 0 : index
    %17 = vector.load %arg6[%c0_12, %c0_13] : memref<128x128xbf16, #tpu.memory_space<vmem>>, vector<128x128xbf16>
    %c0_14 = arith.constant 0 : index
    %c0_15 = arith.constant 0 : index
    %18 = vector.load %arg7[%c0_14, %c0_15] : memref<1x128xf32, #tpu.memory_space<vmem>>, vector<1x128xf32>
    %cst_16 = arith.constant dense<0.000000e+00> : vector<32x128xf32>
    %19 = tpu.matmul %16, %17, %cst_16 {dimension_numbers = #tpu.dot_dimension_numbers<[1], [0], [0], [1], [0, 0, 1, 1], [], []>} : vector<32x128xbf16>, vector<128x128xbf16>, vector<32x128xf32> -> vector<32x128xf32>
    %20 = vector.broadcast %18 : vector<1x128xf32> to vector<32x128xf32>
    %21 = arith.addf %19, %20 : vector<32x128xf32>
    %22 = math.tanh %21 : vector<32x128xf32>
    %23 = arith.truncf %22 : vector<32x128xf32> to vector<32x128xbf16>
    %c0_17 = arith.constant 0 : index
    %c0_18 = arith.constant 0 : index
    %24 = vector.load %arg8[%c0_17, %c0_18] : memref<128x128xbf16, #tpu.memory_space<vmem>>, vector<128x128xbf16>
    %c0_19 = arith.constant 0 : index
    %c0_20 = arith.constant 0 : index
    %25 = vector.load %arg9[%c0_19, %c0_20] : memref<1x128xf32, #tpu.memory_space<vmem>>, vector<1x128xf32>
    %cst_21 = arith.constant dense<0.000000e+00> : vector<32x128xf32>
    %26 = tpu.matmul %23, %24, %cst_21 {dimension_numbers = #tpu.dot_dimension_numbers<[1], [0], [0], [1], [0, 0, 1, 1], [], []>} : vector<32x128xbf16>, vector<128x128xbf16>, vector<32x128xf32> -> vector<32x128xf32>
    %27 = vector.broadcast %25 : vector<1x128xf32> to vector<32x128xf32>
    %28 = arith.addf %26, %27 : vector<32x128xf32>
    %cst_22 = arith.constant 0.000000e+00 : f32
    %29 = vector.broadcast %cst_22 : f32 to vector<32x128xf32>
    %30 = arith.maximumf %28, %29 : vector<32x128xf32>
    %31 = arith.truncf %30 : vector<32x128xf32> to vector<32x128xbf16>
    %c0_23 = arith.constant 0 : index
    %c0_24 = arith.constant 0 : index
    %32 = vector.load %arg10[%c0_23, %c0_24] : memref<128x128xbf16, #tpu.memory_space<vmem>>, vector<128x128xbf16>
    %c0_25 = arith.constant 0 : index
    %c0_26 = arith.constant 0 : index
    %33 = vector.load %arg11[%c0_25, %c0_26] : memref<1x128xf32, #tpu.memory_space<vmem>>, vector<1x128xf32>
    %cst_27 = arith.constant dense<0.000000e+00> : vector<32x128xf32>
    %34 = tpu.matmul %31, %32, %cst_27 {dimension_numbers = #tpu.dot_dimension_numbers<[1], [0], [0], [1], [0, 0, 1, 1], [], []>} : vector<32x128xbf16>, vector<128x128xbf16>, vector<32x128xf32> -> vector<32x128xf32>
    %35 = vector.broadcast %33 : vector<1x128xf32> to vector<32x128xf32>
    %36 = arith.addf %34, %35 : vector<32x128xf32>
    %cst_28 = arith.constant 0.000000e+00 : f32
    %37 = vector.broadcast %cst_28 : f32 to vector<32x128xf32>
    %38 = arith.maximumf %36, %37 : vector<32x128xf32>
    %39 = arith.truncf %38 : vector<32x128xf32> to vector<32x128xbf16>
    %c0_29 = arith.constant 0 : index
    %c0_30 = arith.constant 0 : index
    %40 = vector.load %arg12[%c0_29, %c0_30] : memref<128x128xbf16, #tpu.memory_space<vmem>>, vector<128x128xbf16>
    %c0_31 = arith.constant 0 : index
    %c0_32 = arith.constant 0 : index
    %41 = vector.load %arg13[%c0_31, %c0_32] : memref<1x128xf32, #tpu.memory_space<vmem>>, vector<1x128xf32>
    %cst_33 = arith.constant dense<0.000000e+00> : vector<32x128xf32>
    %42 = tpu.matmul %39, %40, %cst_33 {dimension_numbers = #tpu.dot_dimension_numbers<[1], [0], [0], [1], [0, 0, 1, 1], [], []>} : vector<32x128xbf16>, vector<128x128xbf16>, vector<32x128xf32> -> vector<32x128xf32>
    %43 = vector.broadcast %41 : vector<1x128xf32> to vector<32x128xf32>
    %44 = arith.addf %42, %43 : vector<32x128xf32>
    %cst_34 = arith.constant 0.000000e+00 : f32
    %45 = vector.broadcast %cst_34 : f32 to vector<32x128xf32>
    %46 = arith.maximumf %44, %45 : vector<32x128xf32>
    %c0_35 = arith.constant 0 : index
    %c0_36 = arith.constant 0 : index
    %47 = vector.load %arg14[%c0_35, %c0_36] : memref<32x128xf32, #tpu.memory_space<vmem>>, vector<32x128xf32>
    tpu.vector_store %arg14[%c0_35, %c0_36], %46 {strides = array<i32>} : memref<32x128xf32, #tpu.memory_space<vmem>>, vector<32x128xf32>,
    return
  }
  func.func @transform_0(%arg0: i32) -> (i32, i32) {
    %c0_i32 = arith.constant 0 : i32
    %c0_i32_0 = arith.constant 0 : i32
    return %arg0, %c0_i32 : i32, i32
  }
  func.func @transform_1(%arg0: i32) -> (i32, i32) {
    %c0_i32 = arith.constant 0 : i32
    %c0_i32_0 = arith.constant 0 : i32
    %c0_i32_1 = arith.constant 0 : i32
    return %c0_i32, %c0_i32_0 : i32, i32
  }
  func.func @transform_2(%arg0: i32) -> (i32, i32) {
    %c0_i32 = arith.constant 0 : i32
    %c0_i32_0 = arith.constant 0 : i32
    %c0_i32_1 = arith.constant 0 : i32
    return %c0_i32, %c0_i32_0 : i32, i32
  }
  func.func @transform_3(%arg0: i32) -> (i32, i32) {
    %c0_i32 = arith.constant 0 : i32
    %c0_i32_0 = arith.constant 0 : i32
    %c0_i32_1 = arith.constant 0 : i32
    return %c0_i32, %c0_i32_0 : i32, i32
  }
  func.func @transform_4(%arg0: i32) -> (i32, i32) {
    %c0_i32 = arith.constant 0 : i32
    %c0_i32_0 = arith.constant 0 : i32
    %c0_i32_1 = arith.constant 0 : i32
    return %c0_i32, %c0_i32_0 : i32, i32
  }
  func.func @transform_5(%arg0: i32) -> (i32, i32) {
    %c0_i32 = arith.constant 0 : i32
    %c0_i32_0 = arith.constant 0 : i32
    %c0_i32_1 = arith.constant 0 : i32
    return %c0_i32, %c0_i32_0 : i32, i32
  }
  func.func @transform_6(%arg0: i32) -> (i32, i32) {
    %c0_i32 = arith.constant 0 : i32
    %c0_i32_0 = arith.constant 0 : i32
    %c0_i32_1 = arith.constant 0 : i32
    return %c0_i32, %c0_i32_0 : i32, i32
  }
  func.func @transform_7(%arg0: i32) -> (i32, i32) {
    %c0_i32 = arith.constant 0 : i32
    %c0_i32_0 = arith.constant 0 : i32
    %c0_i32_1 = arith.constant 0 : i32
    return %c0_i32, %c0_i32_0 : i32, i32
  }
  func.func @transform_8(%arg0: i32) -> (i32, i32) {
    %c0_i32 = arith.constant 0 : i32
    %c0_i32_0 = arith.constant 0 : i32
    %c0_i32_1 = arith.constant 0 : i32
    return %c0_i32, %c0_i32_0 : i32, i32
  }
  func.func @transform_9(%arg0: i32) -> (i32, i32) {
    %c0_i32 = arith.constant 0 : i32
    %c0_i32_0 = arith.constant 0 : i32
    %c0_i32_1 = arith.constant 0 : i32
    return %c0_i32, %c0_i32_0 : i32, i32
  }
  func.func @transform_10(%arg0: i32) -> (i32, i32) {
    %c0_i32 = arith.constant 0 : i32
    %c0_i32_0 = arith.constant 0 : i32
    %c0_i32_1 = arith.constant 0 : i32
    return %c0_i32, %c0_i32_0 : i32, i32
  }
  func.func @transform_11(%arg0: i32) -> (i32, i32) {
    %c0_i32 = arith.constant 0 : i32
    %c0_i32_0 = arith.constant 0 : i32
    %c0_i32_1 = arith.constant 0 : i32
    return %c0_i32, %c0_i32_0 : i32, i32
  }
  func.func @transform_12(%arg0: i32) -> (i32, i32) {
    %c0_i32 = arith.constant 0 : i32
    %c0_i32_0 = arith.constant 0 : i32
    %c0_i32_1 = arith.constant 0 : i32
    return %c0_i32, %c0_i32_0 : i32, i32
  }
  func.func @transform_13(%arg0: i32) -> (i32, i32) {
    %c0_i32 = arith.constant 0 : i32
    %c0_i32_0 = arith.constant 0 : i32
    return %arg0, %c0_i32 : i32, i32
  }
}

</mosaic_0001>

<llo_original>
// kernel: tpu_custom_call.1
$region0: #{tpu_custom_call.1}
  #allocation0 [shape = 'u32[]', space=smem, size = 0x4, offset = 0x4, fixed_abs, tag = 'smem constant byte address 0x4 - core index']
  #allocation1 [shape = 'u32[144,128]{1,0:T(1,128)}', space=vmem, size = 0x12000, scoped, tag = 'internal scratch']
  %s0 = inlined_call_operand.hbm [shape: bf16[32,128], index: 0, kind: input, shape index: {}]
  %s1 = inlined_call_operand.hbm [shape: bf16[128,128], index: 1, kind: input, shape index: {}]
  %s2 = inlined_call_operand.vmem [shape: f32[1,128], index: 2, kind: input, shape index: {}]
  %s3 = inlined_call_operand.hbm [shape: bf16[128,128], index: 3, kind: input, shape index: {}]
  %s4 = inlined_call_operand.vmem [shape: f32[1,128], index: 4, kind: input, shape index: {}]
  %s5 = inlined_call_operand.hbm [shape: bf16[128,128], index: 5, kind: input, shape index: {}]
  %s6 = inlined_call_operand.vmem [shape: f32[1,128], index: 6, kind: input, shape index: {}]
  %s7 = inlined_call_operand.hbm [shape: bf16[128,128], index: 7, kind: input, shape index: {}]
  %s8 = inlined_call_operand.vmem [shape: f32[1,128], index: 8, kind: input, shape index: {}]
  %s9 = inlined_call_operand.hbm [shape: bf16[128,128], index: 9, kind: input, shape index: {}]
  %s10 = inlined_call_operand.vmem [shape: f32[1,128], index: 10, kind: input, shape index: {}]
  %s11 = inlined_call_operand.hbm [shape: bf16[128,128], index: 11, kind: input, shape index: {}]
  %s12 = inlined_call_operand.vmem [shape: f32[1,128], index: 12, kind: input, shape index: {}]
  %s13 = inlined_call_operand.hbm [shape: f32[32,128], index: 13, kind: output, shape index: {}]
  %s14 = sld [smem:[#allocation0]]
  $region90: #{tpu_custom_call.1} parent=0
    _
  %s16 = ssub.s32 1, %s14
  %s17 = scalar_select 0, %s16, %s14
  $region1: #{tpu_custom_call.1} parent=0
    #allocation2 [shape = 'u8[8192]{0}', space=vmem, size = 0x2000, scoped, tag = 'input window, operand 0, single buffered']
    #allocation3 [shape = 's32[1]{0}', space=sflag, size = 0x4, scoped, tag = 'scoped memory for tpu_custom_call.1']
    #allocation4 [shape = 's32[1]{0}', space=sflag, size = 0x4, scoped, tag = 'scoped memory for tpu_custom_call.1']
    #allocation5 [shape = 'u8[32768]{0}', space=vmem, size = 0x8000, scoped, tag = 'input window, operand 1, single buffered']
    #allocation6 [shape = 's32[1]{0}', space=sflag, size = 0x4, scoped, tag = 'scoped memory for tpu_custom_call.1']
    #allocation7 [shape = 'u8[32768]{0}', space=vmem, size = 0x8000, scoped, tag = 'input window, operand 3, single buffered']
    #allocation8 [shape = 'u8[32768]{0}', space=vmem, size = 0x8000, scoped, tag = 'input window, operand 5, single buffered']
    #allocation9 [shape = 's32[1]{0}', space=sflag, size = 0x4, scoped, tag = 'scoped memory for tpu_custom_call.1']
    #allocation10 [shape = 'u8[32768]{0}', space=vmem, size = 0x8000, scoped, tag = 'input window, operand 7, single buffered']
    #allocation11 [shape = 'u8[32768]{0}', space=vmem, size = 0x8000, scoped, tag = 'input window, operand 9, single buffered']
    #allocation12 [shape = 's32[1]{0}', space=sflag, size = 0x4, scoped, tag = 'scoped memory for tpu_custom_call.1']
    #allocation13 [shape = 'u8[32768]{0}', space=vmem, size = 0x8000, scoped, tag = 'input window, operand 11, single buffered']
    #allocation14 [shape = 'u8[16384]{0}', space=vmem, size = 0x4000, scoped, tag = 'output window, operand 0, single buffered']
    %18 = vsyncpa [#allocation3], 0
    %19 = vsyncpa [#allocation6], 0
    %20 = vsyncpa [#allocation9], 0
    %21 = vsyncpa [#allocation12], 0
    %22 = vsyncpa [#allocation4], 0
    // Predicated region
    $region2: #{tpu_custom_call.1} parent=1 // pred_check
      _
    $region3: #{tpu_custom_call.1} parent=1 // pred_check_branch
      %24 = sbr.rel (0) target = $region5
    $region4: #{tpu_custom_call.1} parent=1 // pred_region
      %s26 = ssub.s32 256, 256
      %27 = vsyncadd [#allocation3], %s26
      %s28 = sshll.u32 [#allocation2], 4
      %s29 = int_to_ptr.vmem [resolvable:$true] %s28
      %34 = dma.hbm_to_vmem [thread:$0]  %s0, 256, %s29, [#allocation3], 64, 64, 4
    $region5: #{tpu_custom_call.1} parent=1 // pred_fallthru
      _
    // Predicated region
    $region6: #{tpu_custom_call.1} parent=1 // pred_check
      _
    $region7: #{tpu_custom_call.1} parent=1 // pred_check_branch
      %36 = sbr.rel (0) target = $region9
    $region8: #{tpu_custom_call.1} parent=1 // pred_region
      %s38 = ssub.s32 1024, 1024
      %39 = vsyncadd [#allocation6], %s38
      %s40 = sshll.u32 [#allocation5], 4
      %s41 = int_to_ptr.vmem [resolvable:$true] %s40
      %46 = dma.hbm_to_vmem [thread:$0]  %s1, 1024, %s41, [#allocation6], 64, 64, 4
    $region9: #{tpu_custom_call.1} parent=1 // pred_fallthru
      _
    // Predicated region
    $region10: #{tpu_custom_call.1} parent=1 // pred_check
      _
    $region11: #{tpu_custom_call.1} parent=1 // pred_check_branch
      %48 = sbr.rel (0) target = $region13
    $region12: #{tpu_custom_call.1} parent=1 // pred_region
      _
    $region13: #{tpu_custom_call.1} parent=1 // pred_fallthru
      _
    // Predicated region
    $region14: #{tpu_custom_call.1} parent=1 // pred_check
      _
    $region15: #{tpu_custom_call.1} parent=1 // pred_check_branch
      %50 = sbr.rel (0) target = $region17
    $region16: #{tpu_custom_call.1} parent=1 // pred_region
      %s52 = ssub.s32 1024, 1024
      %53 = vsyncadd [#allocation6], %s52
      %s54 = sshll.u32 [#allocation7], 4
      %s55 = int_to_ptr.vmem [resolvable:$true] %s54
      %60 = dma.hbm_to_vmem [thread:$0]  %s3, 1024, %s55, [#allocation6], 64, 64, 4
    $region17: #{tpu_custom_call.1} parent=1 // pred_fallthru
      _
    // Predicated region
    $region18: #{tpu_custom_call.1} parent=1 // pred_check
      _
    $region19: #{tpu_custom_call.1} parent=1 // pred_check_branch
      %62 = sbr.rel (0) target = $region21
    $region20: #{tpu_custom_call.1} parent=1 // pred_region
      _
    $region21: #{tpu_custom_call.1} parent=1 // pred_fallthru
      _
    // Predicated region
    $region22: #{tpu_custom_call.1} parent=1 // pred_check
      _
    $region23: #{tpu_custom_call.1} parent=1 // pred_check_branch
      %64 = sbr.rel (0) target = $region25
    $region24: #{tpu_custom_call.1} parent=1 // pred_region
      %s66 = ssub.s32 1024, 1024
      %67 = vsyncadd [#allocation9], %s66
      %s68 = sshll.u32 [#allocation8], 4
      %s69 = int_to_ptr.vmem [resolvable:$true] %s68
      %74 = dma.hbm_to_vmem [thread:$0]  %s5, 1024, %s69, [#allocation9], 64, 64, 4
    $region25: #{tpu_custom_call.1} parent=1 // pred_fallthru
      _
    // Predicated region
    $region26: #{tpu_custom_call.1} parent=1 // pred_check
      _
    $region27: #{tpu_custom_call.1} parent=1 // pred_check_branch
      %76 = sbr.rel (0) target = $region29
    $region28: #{tpu_custom_call.1} parent=1 // pred_region
      _
    $region29: #{tpu_custom_call.1} parent=1 // pred_fallthru
      _
    // Predicated region
    $region30: #{tpu_custom_call.1} parent=1 // pred_check
      _
    $region31: #{tpu_custom_call.1} parent=1 // pred_check_branch
      %78 = sbr.rel (0) target = $region33
    $region32: #{tpu_custom_call.1} parent=1 // pred_region
      %s80 = ssub.s32 1024, 1024
      %81 = vsyncadd [#allocation9], %s80
      %s82 = sshll.u32 [#allocation10], 4
      %s83 = int_to_ptr.vmem [resolvable:$true] %s82
      %88 = dma.hbm_to_vmem [thread:$0]  %s7, 1024, %s83, [#allocation9], 64, 64, 4
    $region33: #{tpu_custom_call.1} parent=1 // pred_fallthru
      _
    // Predicated region
    $region34: #{tpu_custom_call.1} parent=1 // pred_check
      _
    $region35: #{tpu_custom_call.1} parent=1 // pred_check_branch
      %90 = sbr.rel (0) target = $region37
    $region36: #{tpu_custom_call.1} parent=1 // pred_region
      _
    $region37: #{tpu_custom_call.1} parent=1 // pred_fallthru
      _
    // Predicated region
    $region38: #{tpu_custom_call.1} parent=1 // pred_check
      _
    $region39: #{tpu_custom_call.1} parent=1 // pred_check_branch
      %92 = sbr.rel (0) target = $region41
    $region40: #{tpu_custom_call.1} parent=1 // pred_region
      %s94 = ssub.s32 1024, 1024
      %95 = vsyncadd [#allocation12], %s94
      %s96 = sshll.u32 [#allocation11], 4
      %s97 = int_to_ptr.vmem [resolvable:$true] %s96
      %102 = dma.hbm_to_vmem [thread:$0]  %s9, 1024, %s97, [#allocation12], 64, 64, 4
    $region41: #{tpu_custom_call.1} parent=1 // pred_fallthru
      _
    // Predicated region
    $region42: #{tpu_custom_call.1} parent=1 // pred_check
      _
    $region43: #{tpu_custom_call.1} parent=1 // pred_check_branch
      %104 = sbr.rel (0) target = $region45
    $region44: #{tpu_custom_call.1} parent=1 // pred_region
      _
    $region45: #{tpu_custom_call.1} parent=1 // pred_fallthru
      _
    // Predicated region
    $region46: #{tpu_custom_call.1} parent=1 // pred_check
      _
    $region47: #{tpu_custom_call.1} parent=1 // pred_check_branch
      %106 = sbr.rel (0) target = $region49
    $region48: #{tpu_custom_call.1} parent=1 // pred_region
      %s108 = ssub.s32 1024, 1024
      %109 = vsyncadd [#allocation12], %s108
      %s110 = sshll.u32 [#allocation13], 4
      %s111 = int_to_ptr.vmem [resolvable:$true] %s110
      %116 = dma.hbm_to_vmem [thread:$0]  %s11, 1024, %s111, [#allocation12], 64, 64, 4
    $region49: #{tpu_custom_call.1} parent=1 // pred_fallthru
      _
    // Predicated region
    $region50: #{tpu_custom_call.1} parent=1 // pred_check
      _
    $region51: #{tpu_custom_call.1} parent=1 // pred_check_branch
      %118 = sbr.rel (0) target = $region53
    $region52: #{tpu_custom_call.1} parent=1 // pred_region
      _
    $region53: #{tpu_custom_call.1} parent=1 // pred_fallthru
      _
    // Predicated region
    $region54: #{tpu_custom_call.1} parent=1 // pred_check
      _
    $region55: #{tpu_custom_call.1} parent=1 // pred_check_branch
      %120 = sbr.rel (0) target = $region57
    $region56: #{tpu_custom_call.1} parent=1 // pred_region
      %121 = dma.done [#allocation3], 256
    $region57: #{tpu_custom_call.1} parent=1 // pred_fallthru
      _
    // Predicated region
    $region58: #{tpu_custom_call.1} parent=1 // pred_check
      _
    $region59: #{tpu_custom_call.1} parent=1 // pred_check_branch
      %123 = sbr.rel (0) target = $region61
    $region60: #{tpu_custom_call.1} parent=1 // pred_region
      %124 = dma.done [#allocation6], 1024
    $region61: #{tpu_custom_call.1} parent=1 // pred_fallthru
      _
    // Predicated region
    $region62: #{tpu_custom_call.1} parent=1 // pred_check
      _
    $region63: #{tpu_custom_call.1} parent=1 // pred_check_branch
      %126 = sbr.rel (0) target = $region65
    $region64: #{tpu_custom_call.1} parent=1 // pred_region
      %127 = dma.done [#allocation6], 1024
    $region65: #{tpu_custom_call.1} parent=1 // pred_fallthru
      _
    // Predicated region
    $region66: #{tpu_custom_call.1} parent=1 // pred_check
      _
    $region67: #{tpu_custom_call.1} parent=1 // pred_check_branch
      %129 = sbr.rel (0) target = $region69
    $region68: #{tpu_custom_call.1} parent=1 // pred_region
      %130 = dma.done [#allocation9], 1024
    $region69: #{tpu_custom_call.1} parent=1 // pred_fallthru
      _
    // Predicated region
    $region70: #{tpu_custom_call.1} parent=1 // pred_check
      _
    $region71: #{tpu_custom_call.1} parent=1 // pred_check_branch
      %132 = sbr.rel (0) target = $region73
    $region72: #{tpu_custom_call.1} parent=1 // pred_region
      %133 = dma.done [#allocation9], 1024
    $region73: #{tpu_custom_call.1} parent=1 // pred_fallthru
      _
    // Predicated region
    $region74: #{tpu_custom_call.1} parent=1 // pred_check
      _
    $region75: #{tpu_custom_call.1} parent=1 // pred_check_branch
      %135 = sbr.rel (0) target = $region77
    $region76: #{tpu_custom_call.1} parent=1 // pred_region
      %136 = dma.done [#allocation12], 1024
    $region77: #{tpu_custom_call.1} parent=1 // pred_fallthru
      _
    // Predicated region
    $region78: #{tpu_custom_call.1} parent=1 // pred_check
      _
    $region79: #{tpu_custom_call.1} parent=1 // pred_check_branch
      %138 = sbr.rel (0) target = $region81
    $region80: #{tpu_custom_call.1} parent=1 // pred_region
      %139 = dma.done [#allocation12], 1024
    $region81: #{tpu_custom_call.1} parent=1 // pred_fallthru
      _
    %v141 = vld [vmem:[#allocation2] sm:$0xf]
    %v142 = vld [vmem:[#allocation2 + $0x4] sm:$0xf]
    %v143 = vld [vmem:[#allocation2 + $0x8] sm:$0xf]
    %v144 = vld [vmem:[#allocation2 + $0xc] sm:$0xf]
    %v145 = vld [vmem:[#allocation5] sm:$0xf]
    %v146 = vld [vmem:[#allocation5 + $0x4] sm:$0xf]
    %v147 = vld [vmem:[#allocation5 + $0x8] sm:$0xf]
    %v148 = vld [vmem:[#allocation5 + $0xc] sm:$0xf]
    %v149 = vld [vmem:[#allocation5 + $0x10] sm:$0xf]
    %v150 = vld [vmem:[#allocation5 + $0x14] sm:$0xf]
    %v151 = vld [vmem:[#allocation5 + $0x18] sm:$0xf]
    %v152 = vld [vmem:[#allocation5 + $0x1c] sm:$0xf]
    %v153 = vld [vmem:[#allocation5 + $0x20] sm:$0xf]
    %v154 = vld [vmem:[#allocation5 + $0x24] sm:$0xf]
    %v155 = vld [vmem:[#allocation5 + $0x28] sm:$0xf]
    %v156 = vld [vmem:[#allocation5 + $0x2c] sm:$0xf]
    %v157 = vld [vmem:[#allocation5 + $0x30] sm:$0xf]
    %v158 = vld [vmem:[#allocation5 + $0x34] sm:$0xf]
    %v159 = vld [vmem:[#allocation5 + $0x38] sm:$0xf]
    %v160 = vld [vmem:[#allocation5 + $0x3c] sm:$0xf]
    %v161 = vld [vmem:[%s2] sm:$0x1]
    %v163 = vlaneseq
    %v164 = vshrl.u32 %v163, 7
    %v165 = vsub.s32 0, %v164
    %v166 = vrot.slane %v161, %v165
    %v172 = vunpack.c.l.b16 %v141
    %v173 = vunpack.c.l.b16 %v142
    %v174 = vunpack.c.l.b16 %v143
    %v175 = vunpack.c.l.b16 %v144
    %v176 = vpack.c.b16 %v173, %v172
    %v177 = vpack.c.b16 %v175, %v174
    %v196 = vunpack.c.l.b16 %v145
    %v197 = vunpack.c.l.b16 %v146
    %v198 = vunpack.c.l.b16 %v147
    %v199 = vunpack.c.l.b16 %v148
    %v200 = vunpack.c.l.b16 %v149
    %v201 = vunpack.c.l.b16 %v150
    %v202 = vunpack.c.l.b16 %v151
    %v203 = vunpack.c.l.b16 %v152
    %v204 = vunpack.c.l.b16 %v153
    %v205 = vunpack.c.l.b16 %v154
    %v206 = vunpack.c.l.b16 %v155
    %v207 = vunpack.c.l.b16 %v156
    %v208 = vunpack.c.l.b16 %v157
    %v209 = vunpack.c.l.b16 %v158
    %v210 = vunpack.c.l.b16 %v159
    %v211 = vunpack.c.l.b16 %v160
    %v212 = vpack.c.b16 %v197, %v196
    %v213 = vpack.c.b16 %v199, %v198
    %v214 = vpack.c.b16 %v201, %v200
    %v215 = vpack.c.b16 %v203, %v202
    %v216 = vpack.c.b16 %v205, %v204
    %v217 = vpack.c.b16 %v207, %v206
    %v218 = vpack.c.b16 %v209, %v208
    %v219 = vpack.c.b16 %v211, %v210
    %228 = vmatprep.subr.bf16.mxu0 0
    %229 = vmatpush1.bf16.msra.mxu0 %v212
    %230 = vmatprep.subr.bf16.mxu0 0
    %231 = vmatpush1.bf16.msra.mxu0 %v213
    %232 = vmatprep.subr.bf16.mxu0 0
    %233 = vmatpush1.bf16.msra.mxu0 %v214
    %234 = vmatprep.subr.bf16.mxu0 0
    %235 = vmatpush1.bf16.msra.mxu0 %v215
    %236 = vmatprep.subr.bf16.mxu0 0
    %237 = vmatpush1.bf16.msra.mxu0 %v216
    %238 = vmatprep.subr.bf16.mxu0 0
    %239 = vmatpush1.bf16.msra.mxu0 %v217
    %240 = vmatprep.subr.bf16.mxu0 0
    %241 = vmatpush1.bf16.msra.mxu0 %v218
    %242 = vmatprep.subr.bf16.mxu0 0
    %243 = vmatpush1.bf16.msra.mxu0 %v219
    %244 = vmatprep.subr.bf16.mxu0 0
    %245 = vmatpush1.bf16.msra.mxu0 0
    %246 = vmatprep.subr.bf16.mxu0 0
    %247 = vmatpush1.bf16.msra.mxu0 0
    %248 = vmatprep.subr.bf16.mxu0 0
    %249 = vmatpush1.bf16.msra.mxu0 0
    %250 = vmatprep.subr.bf16.mxu0 0
    %251 = vmatpush1.bf16.msra.mxu0 0
    %252 = vmatprep.subr.bf16.mxu0 0
    %253 = vmatpush1.bf16.msra.mxu0 0
    %254 = vmatprep.subr.bf16.mxu0 0
    %255 = vmatpush1.bf16.msra.mxu0 0
    %256 = vmatprep.subr.bf16.mxu0 0
    %257 = vmatpush1.bf16.msra.mxu0 0
    %258 = vmatprep.subr.bf16.mxu0 0
    %259 = vmatpush1.bf16.msra.mxu0 0
    %260 = vmatprep.mubr.bf16.mxu0 0
    %261 = vmatmul.mubr.bf16.gmra.mrb[0].mxu0 %v176
    %v262 = vpop.f32.mrb[0].mxu0
    %v263 = vadd.f32 %v166, %v262
    %v264 = vpop.f32.mrb[0].mxu0
    %v265 = vpop.f32.mrb[0].mxu0
    %v266 = vadd.f32 %v166, %v265
    %v267 = vpop.f32.mrb[0].mxu0
    %268 = vmatprep.mubr.bf16.mxu0 0
    %269 = vmatmul.mubr.bf16.gmra.mrb[0].mxu0 %v177
    %v270 = vpop.f32.mrb[0].mxu0
    %v271 = vadd.f32 %v166, %v270
    %v272 = vpop.f32.mrb[0].mxu0
    %v273 = vpop.f32.mrb[0].mxu0
    %v274 = vadd.f32 %v166, %v273
    %v275 = vpop.f32.mrb[0].mxu0
    %276 = vdwg.mxu0
    %v277 = vmax.f32 %v263, 0.0
    %v278 = vmax.f32 %v266, 0.0
    %v279 = vmax.f32 %v271, 0.0
    %v280 = vmax.f32 %v274, 0.0
    %v281 = vpack.c.bf16 %v278, %v277
    %v282 = vpack.c.bf16 %v280, %v279
    %v283 = vld [vmem:[#allocation7] sm:$0xf]
    %v284 = vld [vmem:[#allocation7 + $0x4] sm:$0xf]
    %v285 = vld [vmem:[#allocation7 + $0x8] sm:$0xf]
    %v286 = vld [vmem:[#allocation7 + $0xc] sm:$0xf]
    %v287 = vld [vmem:[#allocation7 + $0x10] sm:$0xf]
    %v288 = vld [vmem:[#allocation7 + $0x14] sm:$0xf]
    %v289 = vld [vmem:[#allocation7 + $0x18] sm:$0xf]
    %v290 = vld [vmem:[#allocation7 + $0x1c] sm:$0xf]
    %v291 = vld [vmem:[#allocation7 + $0x20] sm:$0xf]
    %v292 = vld [vmem:[#allocation7 + $0x24] sm:$0xf]
    %v293 = vld [vmem:[#allocation7 + $0x28] sm:$0xf]
    %v294 = vld [vmem:[#allocation7 + $0x2c] sm:$0xf]
    %v295 = vld [vmem:[#allocation7 + $0x30] sm:$0xf]
    %v296 = vld [vmem:[#allocation7 + $0x34] sm:$0xf]
    %v297 = vld [vmem:[#allocation7 + $0x38] sm:$0xf]
    %v298 = vld [vmem:[#allocation7 + $0x3c] sm:$0xf]
    %v299 = vld [vmem:[%s4] sm:$0x1]
    %v301 = vlaneseq
    %v302 = vshrl.u32 %v301, 7
    %v303 = vsub.s32 0, %v302
    %v304 = vrot.slane %v299, %v303
    %v322 = vunpack.c.l.b16 %v283
    %v323 = vunpack.c.l.b16 %v284
    %v324 = vunpack.c.l.b16 %v285
    %v325 = vunpack.c.l.b16 %v286
    %v326 = vunpack.c.l.b16 %v287
    %v327 = vunpack.c.l.b16 %v288
    %v328 = vunpack.c.l.b16 %v289
    %v329 = vunpack.c.l.b16 %v290
    %v330 = vunpack.c.l.b16 %v291
    %v331 = vunpack.c.l.b16 %v292
    %v332 = vunpack.c.l.b16 %v293
    %v333 = vunpack.c.l.b16 %v294
    %v334 = vunpack.c.l.b16 %v295
    %v335 = vunpack.c.l.b16 %v296
    %v336 = vunpack.c.l.b16 %v297
    %v337 = vunpack.c.l.b16 %v298
    %v338 = vpack.c.b16 %v323, %v322
    %v339 = vpack.c.b16 %v325, %v324
    %v340 = vpack.c.b16 %v327, %v326
    %v341 = vpack.c.b16 %v329, %v328
    %v342 = vpack.c.b16 %v331, %v330
    %v343 = vpack.c.b16 %v333, %v332
    %v344 = vpack.c.b16 %v335, %v334
    %v345 = vpack.c.b16 %v337, %v336
    %354 = vmatprep.subr.bf16.mxu0 0
    %355 = vmatpush1.bf16.msra.mxu0 %v338
    %356 = vmatprep.subr.bf16.mxu0 0
    %357 = vmatpush1.bf16.msra.mxu0 %v339
    %358 = vmatprep.subr.bf16.mxu0 0
    %359 = vmatpush1.bf16.msra.mxu0 %v340
    %360 = vmatprep.subr.bf16.mxu0 0
    %361 = vmatpush1.bf16.msra.mxu0 %v341
    %362 = vmatprep.subr.bf16.mxu0 0
    %363 = vmatpush1.bf16.msra.mxu0 %v342
    %364 = vmatprep.subr.bf16.mxu0 0
    %365 = vmatpush1.bf16.msra.mxu0 %v343
    %366 = vmatprep.subr.bf16.mxu0 0
    %367 = vmatpush1.bf16.msra.mxu0 %v344
    %368 = vmatprep.subr.bf16.mxu0 0
    %369 = vmatpush1.bf16.msra.mxu0 %v345
    %370 = vmatprep.subr.bf16.mxu0 0
    %371 = vmatpush1.bf16.msra.mxu0 0
    %372 = vmatprep.subr.bf16.mxu0 0
    %373 = vmatpush1.bf16.msra.mxu0 0
    %374 = vmatprep.subr.bf16.mxu0 0
    %375 = vmatpush1.bf16.msra.mxu0 0
    %376 = vmatprep.subr.bf16.mxu0 0
    %377 = vmatpush1.bf16.msra.mxu0 0
    %378 = vmatprep.subr.bf16.mxu0 0
    %379 = vmatpush1.bf16.msra.mxu0 0
    %380 = vmatprep.subr.bf16.mxu0 0
    %381 = vmatpush1.bf16.msra.mxu0 0
    %382 = vmatprep.subr.bf16.mxu0 0
    %383 = vmatpush1.bf16.msra.mxu0 0
    %384 = vmatprep.subr.bf16.mxu0 0
    %385 = vmatpush1.bf16.msra.mxu0 0
    %386 = vmatprep.mubr.bf16.mxu0 0
    %387 = vmatmul.mubr.bf16.gmra.mrb[0].mxu0 %v281
    %v388 = vpop.f32.mrb[0].mxu0
    %v389 = vadd.f32 %v304, %v388
    %v390 = vpop.f32.mrb[0].mxu0
    %v391 = vpop.f32.mrb[0].mxu0
    %v392 = vadd.f32 %v304, %v391
    %v393 = vpop.f32.mrb[0].mxu0
    %394 = vmatprep.mubr.bf16.mxu0 0
    %395 = vmatmul.mubr.bf16.gmra.mrb[0].mxu0 %v282
    %v396 = vpop.f32.mrb[0].mxu0
    %v397 = vadd.f32 %v304, %v396
    %v398 = vpop.f32.mrb[0].mxu0
    %v399 = vpop.f32.mrb[0].mxu0
    %v400 = vadd.f32 %v304, %v399
    %v401 = vpop.f32.mrb[0].mxu0
    %402 = vdwg.mxu0
    %v403 = vmax.f32 %v389, 0.0
    %v404 = vmax.f32 %v392, 0.0
    %v405 = vmax.f32 %v397, 0.0
    %v406 = vmax.f32 %v400, 0.0
    %v407 = vpack.c.bf16 %v404, %v403
    %v408 = vpack.c.bf16 %v406, %v405
    %v409 = vld [vmem:[#allocation8] sm:$0xf]
    %v410 = vld [vmem:[#allocation8 + $0x4] sm:$0xf]
    %v411 = vld [vmem:[#allocation8 + $0x8] sm:$0xf]
    %v412 = vld [vmem:[#allocation8 + $0xc] sm:$0xf]
    %v413 = vld [vmem:[#allocation8 + $0x10] sm:$0xf]
    %v414 = vld [vmem:[#allocation8 + $0x14] sm:$0xf]
    %v415 = vld [vmem:[#allocation8 + $0x18] sm:$0xf]
    %v416 = vld [vmem:[#allocation8 + $0x1c] sm:$0xf]
    %v417 = vld [vmem:[#allocation8 + $0x20] sm:$0xf]
    %v418 = vld [vmem:[#allocation8 + $0x24] sm:$0xf]
    %v419 = vld [vmem:[#allocation8 + $0x28] sm:$0xf]
    %v420 = vld [vmem:[#allocation8 + $0x2c] sm:$0xf]
    %v421 = vld [vmem:[#allocation8 + $0x30] sm:$0xf]
    %v422 = vld [vmem:[#allocation8 + $0x34] sm:$0xf]
    %v423 = vld [vmem:[#allocation8 + $0x38] sm:$0xf]
    %v424 = vld [vmem:[#allocation8 + $0x3c] sm:$0xf]
    %v425 = vld [vmem:[%s6] sm:$0x1]
    %v427 = vlaneseq
    %v428 = vshrl.u32 %v427, 7
    %v429 = vsub.s32 0, %v428
    %v430 = vrot.slane %v425, %v429
    %v448 = vunpack.c.l.b16 %v409
    %v449 = vunpack.c.l.b16 %v410
    %v450 = vunpack.c.l.b16 %v411
    %v451 = vunpack.c.l.b16 %v412
    %v452 = vunpack.c.l.b16 %v413
    %v453 = vunpack.c.l.b16 %v414
    %v454 = vunpack.c.l.b16 %v415
    %v455 = vunpack.c.l.b16 %v416
    %v456 = vunpack.c.l.b16 %v417
    %v457 = vunpack.c.l.b16 %v418
    %v458 = vunpack.c.l.b16 %v419
    %v459 = vunpack.c.l.b16 %v420
    %v460 = vunpack.c.l.b16 %v421
    %v461 = vunpack.c.l.b16 %v422
    %v462 = vunpack.c.l.b16 %v423
    %v463 = vunpack.c.l.b16 %v424
    %v464 = vpack.c.b16 %v449, %v448
    %v465 = vpack.c.b16 %v451, %v450
    %v466 = vpack.c.b16 %v453, %v452
    %v467 = vpack.c.b16 %v455, %v454
    %v468 = vpack.c.b16 %v457, %v456
    %v469 = vpack.c.b16 %v459, %v458
    %v470 = vpack.c.b16 %v461, %v460
    %v471 = vpack.c.b16 %v463, %v462
    %480 = vmatprep.subr.bf16.mxu0 0
    %481 = vmatpush1.bf16.msra.mxu0 %v464
    %482 = vmatprep.subr.bf16.mxu0 0
    %483 = vmatpush1.bf16.msra.mxu0 %v465
    %484 = vmatprep.subr.bf16.mxu0 0
    %485 = vmatpush1.bf16.msra.mxu0 %v466
    %486 = vmatprep.subr.bf16.mxu0 0
    %487 = vmatpush1.bf16.msra.mxu0 %v467
    %488 = vmatprep.subr.bf16.mxu0 0
    %489 = vmatpush1.bf16.msra.mxu0 %v468
    %490 = vmatprep.subr.bf16.mxu0 0
    %491 = vmatpush1.bf16.msra.mxu0 %v469
    %492 = vmatprep.subr.bf16.mxu0 0
    %493 = vmatpush1.bf16.msra.mxu0 %v470
    %494 = vmatprep.subr.bf16.mxu0 0
    %495 = vmatpush1.bf16.msra.mxu0 %v471
    %496 = vmatprep.subr.bf16.mxu0 0
    %497 = vmatpush1.bf16.msra.mxu0 0
    %498 = vmatprep.subr.bf16.mxu0 0
    %499 = vmatpush1.bf16.msra.mxu0 0
    %500 = vmatprep.subr.bf16.mxu0 0
    %501 = vmatpush1.bf16.msra.mxu0 0
    %502 = vmatprep.subr.bf16.mxu0 0
    %503 = vmatpush1.bf16.msra.mxu0 0
    %504 = vmatprep.subr.bf16.mxu0 0
    %505 = vmatpush1.bf16.msra.mxu0 0
    %506 = vmatprep.subr.bf16.mxu0 0
    %507 = vmatpush1.bf16.msra.mxu0 0
    %508 = vmatprep.subr.bf16.mxu0 0
    %509 = vmatpush1.bf16.msra.mxu0 0
    %510 = vmatprep.subr.bf16.mxu0 0
    %511 = vmatpush1.bf16.msra.mxu0 0
    %512 = vmatprep.mubr.bf16.mxu0 0
    %513 = vmatmul.mubr.bf16.gmra.mrb[0].mxu0 %v407
    %v514 = vpop.f32.mrb[0].mxu0
    %v515 = vadd.f32 %v430, %v514
    %v516 = vpop.f32.mrb[0].mxu0
    %v517 = vpop.f32.mrb[0].mxu0
    %v518 = vadd.f32 %v430, %v517
    %v519 = vpop.f32.mrb[0].mxu0
    %520 = vmatprep.mubr.bf16.mxu0 0
    %521 = vmatmul.mubr.bf16.gmra.mrb[0].mxu0 %v408
    %v522 = vpop.f32.mrb[0].mxu0
    %v523 = vadd.f32 %v430, %v522
    %v524 = vpop.f32.mrb[0].mxu0
    %v525 = vpop.f32.mrb[0].mxu0
    %v526 = vadd.f32 %v430, %v525
    %v527 = vpop.f32.mrb[0].mxu0
    %528 = vdwg.mxu0
    %v529 = vtanh.pop %v515
    %v530 = vtanh.pop %v518
    %v531 = vtanh.pop %v523
    %v532 = vtanh.pop %v526
    %v533 = vpack.c.bf16 %v530, %v529
    %v534 = vpack.c.bf16 %v532, %v531
    %v535 = vld [vmem:[#allocation10] sm:$0xf]
    %v536 = vld [vmem:[#allocation10 + $0x4] sm:$0xf]
    %v537 = vld [vmem:[#allocation10 + $0x8] sm:$0xf]
    %v538 = vld [vmem:[#allocation10 + $0xc] sm:$0xf]
    %v539 = vld [vmem:[#allocation10 + $0x10] sm:$0xf]
    %v540 = vld [vmem:[#allocation10 + $0x14] sm:$0xf]
    %v541 = vld [vmem:[#allocation10 + $0x18] sm:$0xf]
    %v542 = vld [vmem:[#allocation10 + $0x1c] sm:$0xf]
    %v543 = vld [vmem:[#allocation10 + $0x20] sm:$0xf]
    %v544 = vld [vmem:[#allocation10 + $0x24] sm:$0xf]
    %v545 = vld [vmem:[#allocation10 + $0x28] sm:$0xf]
    %v546 = vld [vmem:[#allocation10 + $0x2c] sm:$0xf]
    %v547 = vld [vmem:[#allocation10 + $0x30] sm:$0xf]
    %v548 = vld [vmem:[#allocation10 + $0x34] sm:$0xf]
    %v549 = vld [vmem:[#allocation10 + $0x38] sm:$0xf]
    %v550 = vld [vmem:[#allocation10 + $0x3c] sm:$0xf]
    %v551 = vld [vmem:[%s8] sm:$0x1]
    %v553 = vlaneseq
    %v554 = vshrl.u32 %v553, 7
    %v555 = vsub.s32 0, %v554
    %v556 = vrot.slane %v551, %v555
    %v574 = vunpack.c.l.b16 %v535
    %v575 = vunpack.c.l.b16 %v536
    %v576 = vunpack.c.l.b16 %v537
    %v577 = vunpack.c.l.b16 %v538
    %v578 = vunpack.c.l.b16 %v539
    %v579 = vunpack.c.l.b16 %v540
    %v580 = vunpack.c.l.b16 %v541
    %v581 = vunpack.c.l.b16 %v542
    %v582 = vunpack.c.l.b16 %v543
    %v583 = vunpack.c.l.b16 %v544
    %v584 = vunpack.c.l.b16 %v545
    %v585 = vunpack.c.l.b16 %v546
    %v586 = vunpack.c.l.b16 %v547
    %v587 = vunpack.c.l.b16 %v548
    %v588 = vunpack.c.l.b16 %v549
    %v589 = vunpack.c.l.b16 %v550
    %v590 = vpack.c.b16 %v575, %v574
    %v591 = vpack.c.b16 %v577, %v576
    %v592 = vpack.c.b16 %v579, %v578
    %v593 = vpack.c.b16 %v581, %v580
    %v594 = vpack.c.b16 %v583, %v582
    %v595 = vpack.c.b16 %v585, %v584
    %v596 = vpack.c.b16 %v587, %v586
    %v597 = vpack.c.b16 %v589, %v588
    %606 = vmatprep.subr.bf16.mxu0 0
    %607 = vmatpush1.bf16.msra.mxu0 %v590
    %608 = vmatprep.subr.bf16.mxu0 0
    %609 = vmatpush1.bf16.msra.mxu0 %v591
    %610 = vmatprep.subr.bf16.mxu0 0
    %611 = vmatpush1.bf16.msra.mxu0 %v592
    %612 = vmatprep.subr.bf16.mxu0 0
    %613 = vmatpush1.bf16.msra.mxu0 %v593
    %614 = vmatprep.subr.bf16.mxu0 0
    %615 = vmatpush1.bf16.msra.mxu0 %v594
    %616 = vmatprep.subr.bf16.mxu0 0
    %617 = vmatpush1.bf16.msra.mxu0 %v595
    %618 = vmatprep.subr.bf16.mxu0 0
    %619 = vmatpush1.bf16.msra.mxu0 %v596
    %620 = vmatprep.subr.bf16.mxu0 0
    %621 = vmatpush1.bf16.msra.mxu0 %v597
    %622 = vmatprep.subr.bf16.mxu0 0
    %623 = vmatpush1.bf16.msra.mxu0 0
    %624 = vmatprep.subr.bf16.mxu0 0
    %625 = vmatpush1.bf16.msra.mxu0 0
    %626 = vmatprep.subr.bf16.mxu0 0
    %627 = vmatpush1.bf16.msra.mxu0 0
    %628 = vmatprep.subr.bf16.mxu0 0
    %629 = vmatpush1.bf16.msra.mxu0 0
    %630 = vmatprep.subr.bf16.mxu0 0
    %631 = vmatpush1.bf16.msra.mxu0 0
    %632 = vmatprep.subr.bf16.mxu0 0
    %633 = vmatpush1.bf16.msra.mxu0 0
    %634 = vmatprep.subr.bf16.mxu0 0
    %635 = vmatpush1.bf16.msra.mxu0 0
    %636 = vmatprep.subr.bf16.mxu0 0
    %637 = vmatpush1.bf16.msra.mxu0 0
    %638 = vmatprep.mubr.bf16.mxu0 0
    %639 = vmatmul.mubr.bf16.gmra.mrb[0].mxu0 %v533
    %v640 = vpop.f32.mrb[0].mxu0
    %v641 = vadd.f32 %v556, %v640
    %v642 = vpop.f32.mrb[0].mxu0
    %v643 = vpop.f32.mrb[0].mxu0
    %v644 = vadd.f32 %v556, %v643
    %v645 = vpop.f32.mrb[0].mxu0
    %646 = vmatprep.mubr.bf16.mxu0 0
    %647 = vmatmul.mubr.bf16.gmra.mrb[0].mxu0 %v534
    %v648 = vpop.f32.mrb[0].mxu0
    %v649 = vadd.f32 %v556, %v648
    %v650 = vpop.f32.mrb[0].mxu0
    %v651 = vpop.f32.mrb[0].mxu0
    %v652 = vadd.f32 %v556, %v651
    %v653 = vpop.f32.mrb[0].mxu0
    %654 = vdwg.mxu0
    %v655 = vmax.f32 %v641, 0.0
    %v656 = vmax.f32 %v644, 0.0
    %v657 = vmax.f32 %v649, 0.0
    %v658 = vmax.f32 %v652, 0.0
    %v659 = vpack.c.bf16 %v656, %v655
    %v660 = vpack.c.bf16 %v658, %v657
    %v661 = vld [vmem:[#allocation11] sm:$0xf]
    %v662 = vld [vmem:[#allocation11 + $0x4] sm:$0xf]
    %v663 = vld [vmem:[#allocation11 + $0x8] sm:$0xf]
    %v664 = vld [vmem:[#allocation11 + $0xc] sm:$0xf]
    %v665 = vld [vmem:[#allocation11 + $0x10] sm:$0xf]
    %v666 = vld [vmem:[#allocation11 + $0x14] sm:$0xf]
    %v667 = vld [vmem:[#allocation11 + $0x18] sm:$0xf]
    %v668 = vld [vmem:[#allocation11 + $0x1c] sm:$0xf]
    %v669 = vld [vmem:[#allocation11 + $0x20] sm:$0xf]
    %v670 = vld [vmem:[#allocation11 + $0x24] sm:$0xf]
    %v671 = vld [vmem:[#allocation11 + $0x28] sm:$0xf]
    %v672 = vld [vmem:[#allocation11 + $0x2c] sm:$0xf]
    %v673 = vld [vmem:[#allocation11 + $0x30] sm:$0xf]
    %v674 = vld [vmem:[#allocation11 + $0x34] sm:$0xf]
    %v675 = vld [vmem:[#allocation11 + $0x38] sm:$0xf]
    %v676 = vld [vmem:[#allocation11 + $0x3c] sm:$0xf]
    %v677 = vld [vmem:[%s10] sm:$0x1]
    %v679 = vlaneseq
    %v680 = vshrl.u32 %v679, 7
    %v681 = vsub.s32 0, %v680
    %v682 = vrot.slane %v677, %v681
    %v700 = vunpack.c.l.b16 %v661
    %v701 = vunpack.c.l.b16 %v662
    %v702 = vunpack.c.l.b16 %v663
    %v703 = vunpack.c.l.b16 %v664
    %v704 = vunpack.c.l.b16 %v665
    %v705 = vunpack.c.l.b16 %v666
    %v706 = vunpack.c.l.b16 %v667
    %v707 = vunpack.c.l.b16 %v668
    %v708 = vunpack.c.l.b16 %v669
    %v709 = vunpack.c.l.b16 %v670
    %v710 = vunpack.c.l.b16 %v671
    %v711 = vunpack.c.l.b16 %v672
    %v712 = vunpack.c.l.b16 %v673
    %v713 = vunpack.c.l.b16 %v674
    %v714 = vunpack.c.l.b16 %v675
    %v715 = vunpack.c.l.b16 %v676
    %v716 = vpack.c.b16 %v701, %v700
    %v717 = vpack.c.b16 %v703, %v702
    %v718 = vpack.c.b16 %v705, %v704
    %v719 = vpack.c.b16 %v707, %v706
    %v720 = vpack.c.b16 %v709, %v708
    %v721 = vpack.c.b16 %v711, %v710
    %v722 = vpack.c.b16 %v713, %v712
    %v723 = vpack.c.b16 %v715, %v714
    %732 = vmatprep.subr.bf16.mxu0 0
    %733 = vmatpush1.bf16.msra.mxu0 %v716
    %734 = vmatprep.subr.bf16.mxu0 0
    %735 = vmatpush1.bf16.msra.mxu0 %v717
    %736 = vmatprep.subr.bf16.mxu0 0
    %737 = vmatpush1.bf16.msra.mxu0 %v718
    %738 = vmatprep.subr.bf16.mxu0 0
    %739 = vmatpush1.bf16.msra.mxu0 %v719
    %740 = vmatprep.subr.bf16.mxu0 0
    %741 = vmatpush1.bf16.msra.mxu0 %v720
    %742 = vmatprep.subr.bf16.mxu0 0
    %743 = vmatpush1.bf16.msra.mxu0 %v721
    %744 = vmatprep.subr.bf16.mxu0 0
    %745 = vmatpush1.bf16.msra.mxu0 %v722
    %746 = vmatprep.subr.bf16.mxu0 0
    %747 = vmatpush1.bf16.msra.mxu0 %v723
    %748 = vmatprep.subr.bf16.mxu0 0
    %749 = vmatpush1.bf16.msra.mxu0 0
    %750 = vmatprep.subr.bf16.mxu0 0
    %751 = vmatpush1.bf16.msra.mxu0 0
    %752 = vmatprep.subr.bf16.mxu0 0
    %753 = vmatpush1.bf16.msra.mxu0 0
    %754 = vmatprep.subr.bf16.mxu0 0
    %755 = vmatpush1.bf16.msra.mxu0 0
    %756 = vmatprep.subr.bf16.mxu0 0
    %757 = vmatpush1.bf16.msra.mxu0 0
    %758 = vmatprep.subr.bf16.mxu0 0
    %759 = vmatpush1.bf16.msra.mxu0 0
    %760 = vmatprep.subr.bf16.mxu0 0
    %761 = vmatpush1.bf16.msra.mxu0 0
    %762 = vmatprep.subr.bf16.mxu0 0
    %763 = vmatpush1.bf16.msra.mxu0 0
    %764 = vmatprep.mubr.bf16.mxu0 0
    %765 = vmatmul.mubr.bf16.gmra.mrb[0].mxu0 %v659
    %v766 = vpop.f32.mrb[0].mxu0
    %v767 = vadd.f32 %v682, %v766
    %v768 = vpop.f32.mrb[0].mxu0
    %v769 = vpop.f32.mrb[0].mxu0
    %v770 = vadd.f32 %v682, %v769
    %v771 = vpop.f32.mrb[0].mxu0
    %772 = vmatprep.mubr.bf16.mxu0 0
    %773 = vmatmul.mubr.bf16.gmra.mrb[0].mxu0 %v660
    %v774 = vpop.f32.mrb[0].mxu0
    %v775 = vadd.f32 %v682, %v774
    %v776 = vpop.f32.mrb[0].mxu0
    %v777 = vpop.f32.mrb[0].mxu0
    %v778 = vadd.f32 %v682, %v777
    %v779 = vpop.f32.mrb[0].mxu0
    %780 = vdwg.mxu0
    %v781 = vmax.f32 %v767, 0.0
    %v782 = vmax.f32 %v770, 0.0
    %v783 = vmax.f32 %v775, 0.0
    %v784 = vmax.f32 %v778, 0.0
    %v785 = vpack.c.bf16 %v782, %v781
    %v786 = vpack.c.bf16 %v784, %v783
    %v787 = vld [vmem:[#allocation13] sm:$0xf]
    %v788 = vld [vmem:[#allocation13 + $0x4] sm:$0xf]
    %v789 = vld [vmem:[#allocation13 + $0x8] sm:$0xf]
    %v790 = vld [vmem:[#allocation13 + $0xc] sm:$0xf]
    %v791 = vld [vmem:[#allocation13 + $0x10] sm:$0xf]
    %v792 = vld [vmem:[#allocation13 + $0x14] sm:$0xf]
    %v793 = vld [vmem:[#allocation13 + $0x18] sm:$0xf]
    %v794 = vld [vmem:[#allocation13 + $0x1c] sm:$0xf]
    %v795 = vld [vmem:[#allocation13 + $0x20] sm:$0xf]
    %v796 = vld [vmem:[#allocation13 + $0x24] sm:$0xf]
    %v797 = vld [vmem:[#allocation13 + $0x28] sm:$0xf]
    %v798 = vld [vmem:[#allocation13 + $0x2c] sm:$0xf]
    %v799 = vld [vmem:[#allocation13 + $0x30] sm:$0xf]
    %v800 = vld [vmem:[#allocation13 + $0x34] sm:$0xf]
    %v801 = vld [vmem:[#allocation13 + $0x38] sm:$0xf]
    %v802 = vld [vmem:[#allocation13 + $0x3c] sm:$0xf]
    %v803 = vld [vmem:[%s12] sm:$0x1]
    %v805 = vlaneseq
    %v806 = vshrl.u32 %v805, 7
    %v807 = vsub.s32 0, %v806
    %v808 = vrot.slane %v803, %v807
    %v826 = vunpack.c.l.b16 %v787
    %v827 = vunpack.c.l.b16 %v788
    %v828 = vunpack.c.l.b16 %v789
    %v829 = vunpack.c.l.b16 %v790
    %v830 = vunpack.c.l.b16 %v791
    %v831 = vunpack.c.l.b16 %v792
    %v832 = vunpack.c.l.b16 %v793
    %v833 = vunpack.c.l.b16 %v794
    %v834 = vunpack.c.l.b16 %v795
    %v835 = vunpack.c.l.b16 %v796
    %v836 = vunpack.c.l.b16 %v797
    %v837 = vunpack.c.l.b16 %v798
    %v838 = vunpack.c.l.b16 %v799
    %v839 = vunpack.c.l.b16 %v800
    %v840 = vunpack.c.l.b16 %v801
    %v841 = vunpack.c.l.b16 %v802
    %v842 = vpack.c.b16 %v827, %v826
    %v843 = vpack.c.b16 %v829, %v828
    %v844 = vpack.c.b16 %v831, %v830
    %v845 = vpack.c.b16 %v833, %v832
    %v846 = vpack.c.b16 %v835, %v834
    %v847 = vpack.c.b16 %v837, %v836
    %v848 = vpack.c.b16 %v839, %v838
    %v849 = vpack.c.b16 %v841, %v840
    %858 = vmatprep.subr.bf16.mxu0 0
    %859 = vmatpush1.bf16.msra.mxu0 %v842
    %860 = vmatprep.subr.bf16.mxu0 0
    %861 = vmatpush1.bf16.msra.mxu0 %v843
    %862 = vmatprep.subr.bf16.mxu0 0
    %863 = vmatpush1.bf16.msra.mxu0 %v844
    %864 = vmatprep.subr.bf16.mxu0 0
    %865 = vmatpush1.bf16.msra.mxu0 %v845
    %866 = vmatprep.subr.bf16.mxu0 0
    %867 = vmatpush1.bf16.msra.mxu0 %v846
    %868 = vmatprep.subr.bf16.mxu0 0
    %869 = vmatpush1.bf16.msra.mxu0 %v847
    %870 = vmatprep.subr.bf16.mxu0 0
    %871 = vmatpush1.bf16.msra.mxu0 %v848
    %872 = vmatprep.subr.bf16.mxu0 0
    %873 = vmatpush1.bf16.msra.mxu0 %v849
    %874 = vmatprep.subr.bf16.mxu0 0
    %875 = vmatpush1.bf16.msra.mxu0 0
    %876 = vmatprep.subr.bf16.mxu0 0
    %877 = vmatpush1.bf16.msra.mxu0 0
    %878 = vmatprep.subr.bf16.mxu0 0
    %879 = vmatpush1.bf16.msra.mxu0 0
    %880 = vmatprep.subr.bf16.mxu0 0
    %881 = vmatpush1.bf16.msra.mxu0 0
    %882 = vmatprep.subr.bf16.mxu0 0
    %883 = vmatpush1.bf16.msra.mxu0 0
    %884 = vmatprep.subr.bf16.mxu0 0
    %885 = vmatpush1.bf16.msra.mxu0 0
    %886 = vmatprep.subr.bf16.mxu0 0
    %887 = vmatpush1.bf16.msra.mxu0 0
    %888 = vmatprep.subr.bf16.mxu0 0
    %889 = vmatpush1.bf16.msra.mxu0 0
    %890 = vmatprep.mubr.bf16.mxu0 0
    %891 = vmatmul.mubr.bf16.gmra.mrb[0].mxu0 %v785
    %v892 = vpop.f32.mrb[0].mxu0
    %v893 = vadd.f32 %v808, %v892
    %v894 = vpop.f32.mrb[0].mxu0
    %v895 = vpop.f32.mrb[0].mxu0
    %v896 = vadd.f32 %v808, %v895
    %v897 = vpop.f32.mrb[0].mxu0
    %898 = vmatprep.mubr.bf16.mxu0 0
    %899 = vmatmul.mubr.bf16.gmra.mrb[0].mxu0 %v786
    %v900 = vpop.f32.mrb[0].mxu0
    %v901 = vadd.f32 %v808, %v900
    %v902 = vpop.f32.mrb[0].mxu0
    %v903 = vpop.f32.mrb[0].mxu0
    %v904 = vadd.f32 %v808, %v903
    %v905 = vpop.f32.mrb[0].mxu0
    %906 = vdwg.mxu0
    %v907 = vmax.f32 %v893, 0.0
    %v908 = vmax.f32 %v896, 0.0
    %v909 = vmax.f32 %v901, 0.0
    %v910 = vmax.f32 %v904, 0.0
    %911 = vst [vmem:[#allocation14] sm:$0xff] %v907
    %912 = vst [vmem:[#allocation14 + $0x8] sm:$0xff] %v908
    %913 = vst [vmem:[#allocation14 + $0x10] sm:$0xff] %v909
    %914 = vst [vmem:[#allocation14 + $0x18] sm:$0xff] %v910
    // Predicated region
    $region82: #{tpu_custom_call.1} parent=1 // pred_check
      _
    $region83: #{tpu_custom_call.1} parent=1 // pred_check_branch
      %916 = sbr.rel (0) target = $region85
    $region84: #{tpu_custom_call.1} parent=1 // pred_region
      %s918 = ssub.s32 512, 512
      %919 = vsyncadd [#allocation4], %s918
      %s920 = sshll.u32 [#allocation14], 4
      %s921 = int_to_ptr.vmem [resolvable:$true] %s920
      %926 = dma.vmem_to_hbm [thread:$0]  %s921, 512, %s13, [#allocation4], 128, 128, 8
    $region85: #{tpu_custom_call.1} parent=1 // pred_fallthru
      _
    // Predicated region
    $region86: #{tpu_custom_call.1} parent=1 // pred_check
      _
    $region87: #{tpu_custom_call.1} parent=1 // pred_check_branch
      %928 = sbr.rel (0) target = $region89
    $region88: #{tpu_custom_call.1} parent=1 // pred_region
      %929 = dma.done [#allocation4], 512
    $region89: #{tpu_custom_call.1} parent=1 // pred_fallthru
      _
    %930 = vsyncpa [#allocation3], 1
    %931 = vsyncpa [#allocation6], 1
    %932 = vsyncpa [#allocation9], 1
    %933 = vsyncpa [#allocation12], 1
    %934 = vsyncpa [#allocation4], 1

</llo_original>
